<compile_context>
chip_gen: v7x
topology: tpu7x:2x2x1
jax: 0.10.0
libtpu: 0.0.40
codegen_flags: <defaults>
</compile_context>

<pallas_src>
import jax
import jax.numpy as jnp
from jax.experimental import pallas as pl
from jax.experimental.pallas import tpu as pltpu


def _hbm_copy_kernel(x_hbm_ref, o_hbm_ref):
    """Whole-array identity copy as one HBM->HBM DMA (no VMEM staging)."""

    def body(sem):
        cp = pltpu.make_async_copy(x_hbm_ref, o_hbm_ref, sem)
        cp.start()
        cp.wait()

    pl.run_scoped(body, pltpu.SemaphoreType.DMA)


def _pallas_identity_copy(x):
    """Copy `x` through a Pallas kernel (single direct HBM->HBM DMA)."""
    if x.size == 0:
        return x  # nothing to move

    # Keep the out_shape identical to the input shape so the full-ref DMA is a
    # trivial same-shape copy; the squeeze itself is a metadata reshape outside.
    return pl.pallas_call(
        _hbm_copy_kernel,
        out_shape=jax.ShapeDtypeStruct(x.shape, x.dtype),
        in_specs=[pl.BlockSpec(memory_space=pl.ANY)],
        out_specs=pl.BlockSpec(memory_space=pl.ANY),
    )(x)


def same_forward(x, use_pallas=False):
    """JAX/Pallas equivalent of Same.forward: x.squeeze(0).

    Default (`use_pallas=False`) is the optimal metadata-only squeeze (zero
    bytes of HBM traffic).  With `use_pallas=True` the data is routed through
    the Pallas HBM->HBM DMA identity-copy kernel.
    """
    # PyTorch squeeze(0) semantics: drop the leading dim iff it has size 1.
    if x.ndim > 0 and x.shape[0] == 1:
        out_shape = x.shape[1:]
    else:
        out_shape = x.shape

    if not use_pallas:
        return jnp.reshape(x, out_shape)  # pure metadata, zero-cost

    y = _pallas_identity_copy(x)
    return jnp.reshape(y, out_shape)


if __name__ == "__main__":
    key = jax.random.PRNGKey(0)

    # NCHW input with leading batch dim of 1 so squeeze(0) actually removes it.
    x = jax.random.normal(key, (1, 4, 16, 16), dtype=jnp.float32)
    y = jax.block_until_ready(same_forward(x, use_pallas=True))
    assert y.shape == (4, 16, 16), y.shape
    assert y.dtype == x.dtype
    assert bool(jnp.all(y == x[0]))

    # Pass-through when leading dim != 1.
    x2 = jax.random.normal(key, (2, 4, 16, 16), dtype=jnp.float32)
    y2 = jax.block_until_ready(same_forward(x2, use_pallas=True))
    assert y2.shape == x2.shape
    assert bool(jnp.all(y2 == x2))

    # Ragged / non-(8,128)-aligned element count — handled identically by the
    # direct HBM->HBM DMA (the old (1, n) VMEM fallback is gone).
    x3 = jax.random.normal(key, (1, 3, 5, 7), dtype=jnp.float32)
    y3 = jax.block_until_ready(same_forward(x3, use_pallas=True))
    assert y3.shape == (3, 5, 7)
    assert bool(jnp.all(y3 == x3[0]))

    # bf16 path (dtype-agnostic: the DMA copies raw bytes).
    x4 = jax.random.normal(key, (1, 8, 32, 128), dtype=jnp.bfloat16)
    y4 = jax.block_until_ready(same_forward(x4, use_pallas=True))
    assert y4.shape == (8, 32, 128)
    assert bool(jnp.all(y4 == x4[0]))

    # Default (recommended) metadata-only path agrees.
    y5 = jax.block_until_ready(same_forward(x))
    assert y5.shape == (4, 16, 16)
    assert bool(jnp.all(y5 == x[0]))

    print("KERNEL_OK")
</pallas_src>

<mosaic_0001>
module attributes {stable_mosaic.version = 11 : i64} {
  func.func @_hbm_copy_kernel(%arg0: memref<1x4x16x16xf32, #tpu.memory_space<any>>, %arg1: memref<1x4x16x16xf32, #tpu.memory_space<any>>) attributes {dimension_semantics = [], scalar_prefetch = 0 : i64, scratch_operands = 0 : i64, tpu.core_type = #tpu.core_type<tc>} {
    "tpu.region"() ({
      %0 = tpu.sem_alloc : memref<!tpu.dma_semaphore, #tpu.memory_space<semaphore_mem>>
      tpu.enqueue_dma source(%arg0 : memref<1x4x16x16xf32, #tpu.memory_space<any>>) target(%arg1 : memref<1x4x16x16xf32, #tpu.memory_space<any>>) target_semaphore(%0 : memref<!tpu.dma_semaphore, #tpu.memory_space<semaphore_mem>>)
      tpu.wait_dma2 semaphore(%0 : memref<!tpu.dma_semaphore, #tpu.memory_space<semaphore_mem>>) src(%arg0 : memref<1x4x16x16xf32, #tpu.memory_space<any>>) dst(%arg1 : memref<1x4x16x16xf32, #tpu.memory_space<any>>)
      tpu.yield
    }) : () -> ()
    return
  }
}

</mosaic_0001>

<llo_original>
// kernel: tpu_custom_call.1
$region0: #{tpu_custom_call.1}
  #allocation0 [shape = 'u32[]', space=smem, size = 0x4, offset = 0x4, fixed_abs, tag = 'smem constant byte address 0x4 - core index']
  #allocation1 [shape = 'u32[144,128]{1,0:T(1,128)}', space=vmem, size = 0x12000, scoped, tag = 'internal scratch']
  #allocation3 [shape = 's32[]', space=sflag, size = 0x4, offset = 0, fixed_abs, tag = 'sflag constant byte address 0x0 - dummy sync flag']
  #allocation4 [shape = 'u32[0]{0}', space=smem, size = 0, offset = 0, fixed_abs, tag = 'smem constant byte address 0x0 - null']
  %s0 = inlined_call_operand.hbm [shape: f32[1,4,16,16], index: 0, kind: input, shape index: {}]
  %s1 = inlined_call_operand.hbm [shape: f32[1,4,16,16], index: 1, kind: output, shape index: {}]
  %s2 = sld [smem:[#allocation0]]
  $region3: #{tpu_custom_call.1} parent=0
    _
  %s4 = ssub.s32 1, %s2
  %s5 = scalar_select 0, %s4, %s2
  $region2: #{tpu_custom_call.1} parent=0
    #allocation2 [shape = 's32[1]{0}', space=sflag, size = 0x4, scoped, tag = 'scoped memory for tpu_custom_call.1']
    %s7 = sshll.u32 1, 14
    %s8 = sxor.u32 4294967295, %s7
    %s11 = sshll.u32 3, 24
    %s12 = sxor.u32 4294967295, %s11
    %s13 = sand.u32 0, %s12
    %s15 = sor.u32 %s13, 0
    %18 = dma.general %s0, 1024, %s1, [#allocation2], [#allocation3], [#allocation4], %s15, 0
    %s19 = smul.u32 1, 4
    %s20 = smul.u32 %s19, 16
    %s21 = smul.u32 %s20, 1
    %s22 = sshll.u32 %s21, 4
    %23 = dma.done [#allocation2], %s22

</llo_original>
